<compile_context>
chip_gen: v6e
topology: v6e:2x2x1
jax: 0.10.0
libtpu: 0.0.40
codegen_flags: <defaults>
</compile_context>

<pallas_src>
import math

import jax
import jax.numpy as jnp
from jax import lax
from jax.experimental import pallas as pl
from jax.experimental.pallas import tpu as pltpu


def _vmem_capacity_bytes():
    try:
        return int(pltpu.get_tpu_info().vmem_capacity_bytes)
    except Exception:
        return 64 * 1024 * 1024  # conservative (v7x) fallback


def _select_tile_and_vmem(L, S, H, E, D, Hm, in_bytes, out_bytes, emit_attn):
    """Largest L-tile whose double-buffered working set fits the VMEM budget."""
    cap = _vmem_capacity_bytes()
    budget = int(cap * 0.8)

    def estimate(tl):
        db = 2                                       # BlockSpec double buffering
        b = db * tl * H * E * in_bytes               # Q block
        b += db * S * H * E * in_bytes               # K block
        b += db * S * H * D * in_bytes               # V block
        b += db * Hm * tl * S                        # int8 mask block
        b += db * tl * H * D * out_bytes             # context output block
        if emit_attn:
            b += db * H * tl * S * out_bytes         # A output block
        b += H * S * (E + D) * in_bytes              # head-major K/V scratch
        b += 6 * tl * S * 4                          # f32 softmax working set
        return b

    # TL == L (full dim) is always layout-legal; sub-tiles must divide L and be
    # multiples of 32 so the int8 mask block keeps its (32, 128) packing.
    cands = sorted({L} | {c for c in (512, 256, 128, 64, 32)
                          if c < L and L % c == 0}, reverse=True)
    tl = next((c for c in cands if estimate(c) <= budget), cands[-1])
    vmem_limit = min(int(cap * 0.9), max(estimate(tl) + (8 << 20), 64 << 20))
    return tl, vmem_limit


def _make_full_attention_kernel(scale, H, E, D, Hm, emit_attn):
    def kernel(q_ref, k_ref, v_ref, m_ref, *rest):
        if emit_attn:
            o_ref, a_ref, kt_ref, vt_ref = rest
        else:
            o_ref, kt_ref, vt_ref = rest
            a_ref = None

        # Re-pack K/V head-major into VMEM scratch once per batch (l == 0);
        # reused by every L tile of this batch (grid axis 1 is "arbitrary").
        @pl.when(pl.program_id(1) == 0)
        def _():
            k_all = k_ref[0]                      # (S, H*E) native dtype
            v_all = v_ref[0]                      # (S, H*D) native dtype
            for h in range(H):
                kt_ref[h] = k_all[:, h * E:(h + 1) * E]
                vt_ref[h] = v_all[:, h * D:(h + 1) * D]

        q_all = q_ref[0]                          # (TL, H*E) native dtype
        if Hm == 1:
            keep_shared = m_ref[0, 0] != 0        # (TL, S)

        outs = []
        for h in range(H):
            # Softmax scale applied to Q (TLxE elements) rather than the TLxS
            # score matrix (same result for scale > 0 since scale*(-inf)=-inf).
            q_h = q_all[:, h * E:(h + 1) * E] * scale
            k_h = kt_ref[h]                       # (S, E)
            v_h = vt_ref[h]                       # (S, D)
            keep = keep_shared if Hm == 1 else (m_ref[0, h] != 0)

            # scores = (scale*Q) @ K^T, contracting E directly (no k.T relayout).
            scores = lax.dot_general(
                q_h, k_h,
                dimension_numbers=(((1,), (1,)), ((), ())),
                preferred_element_type=jnp.float32)           # (TL, S) f32
            scores = jnp.where(keep, scores, -jnp.inf)

            row_max = jnp.max(scores, axis=-1, keepdims=True)
            e = jnp.exp(scores - row_max)
            denom = jnp.sum(e, axis=-1, keepdims=True)

            if emit_attn:
                # A is externally visible: exact normalization (no approx vrcp).
                attn = e / denom
                a_ref[0, h] = attn.astype(a_ref.dtype)
                out_h = jnp.dot(attn.astype(v_h.dtype), v_h,
                                preferred_element_type=jnp.float32)
            else:
                # Fast path: normalize AFTER the PV matmul (TLxD instead of
                # TLxS multiplies); EUP approximate reciprocal.
                out_h = jnp.dot(e.astype(v_h.dtype), v_h,
                                preferred_element_type=jnp.float32)
                out_h = out_h * pl.reciprocal(denom, approx=True)
            outs.append(out_h)

        # Single lane-dense store of the whole (TL, H*D) context tile.
        o_ref[0] = jnp.concatenate(outs, axis=-1).astype(o_ref.dtype)

    return kernel


def full_attention(queries, keys, values, attn_mask,
                   scale=None, output_attention=False):
    """Pallas TPU equivalent of osformer FullAttention.forward (eval mode).

    queries: (B, L, H, E)   keys: (B, S, H, E)   values: (B, S, H, D)
    attn_mask: broadcastable to (B, H, L, S); entries == 0 are masked out.
    Returns (V: (B, L, H, D), A: (B, H, L, S) or None).
    """
    B, L, H, E = queries.shape
    _, S, _, D = values.shape
    scale = scale if scale is not None else 1.0 / math.sqrt(E)

    # Free minor-dim merges (no HBM transpose / copy).
    q = queries.reshape(B, L, H * E)
    k = keys.reshape(B, S, H * E)
    v = values.reshape(B, S, H * D)

    # Mask: kept un-broadcast over batch/head (index_map + kernel do the
    # broadcast), carried as int8.
    m = attn_mask != 0
    if m.ndim < 4:
        m = m.reshape((1,) * (4 - m.ndim) + m.shape)
    if m.shape[-2:] != (L, S):
        m = jnp.broadcast_to(m, m.shape[:2] + (L, S))
    Bm, Hm = m.shape[0], m.shape[1]
    assert Bm in (1, B) and Hm in (1, H), "attn_mask not broadcastable to (B,H,L,S)"
    m = m.astype(jnp.int8)

    in_bytes = queries.dtype.itemsize
    out_dtype = queries.dtype
    out_bytes = out_dtype.itemsize

    TL, vmem_limit = _select_tile_and_vmem(
        L, S, H, E, D, Hm, in_bytes, out_bytes, output_attention)
    nl = L // TL
    grid = (B, nl)

    in_specs = [
        pl.BlockSpec((1, TL, H * E), lambda b, l: (b, l, 0)),
        pl.BlockSpec((1, S, H * E), lambda b, l: (b, 0, 0)),
        pl.BlockSpec((1, S, H * D), lambda b, l: (b, 0, 0)),
        pl.BlockSpec((1, Hm, TL, S),
                     lambda b, l: (b if Bm > 1 else 0, 0, l, 0)),
    ]

    v_out_shape = jax.ShapeDtypeStruct((B, L, H * D), out_dtype)
    v_out_spec = pl.BlockSpec((1, TL, H * D), lambda b, l: (b, l, 0))

    if output_attention:
        out_shape = (v_out_shape, jax.ShapeDtypeStruct((B, H, L, S), out_dtype))
        out_specs = [v_out_spec,
                     pl.BlockSpec((1, H, TL, S), lambda b, l: (b, 0, l, 0))]
    else:
        out_shape = (v_out_shape,)
        out_specs = [v_out_spec]

    scratch_shapes = [pltpu.VMEM((H, S, E), keys.dtype),
                      pltpu.VMEM((H, S, D), values.dtype)]

    bytes_accessed = (q.size * in_bytes + k.size * in_bytes + v.size * in_bytes
                      + m.size + B * L * H * D * out_bytes
                      + (B * H * L * S * out_bytes if output_attention else 0))
    cost = pl.CostEstimate(flops=2 * B * H * L * S * (E + D),
                           transcendentals=B * H * L * S,
                           bytes_accessed=bytes_accessed)

    results = pl.pallas_call(
        _make_full_attention_kernel(scale, H, E, D, Hm, output_attention),
        out_shape=out_shape,
        grid_spec=pltpu.PrefetchScalarGridSpec(
            num_scalar_prefetch=0,
            grid=grid,
            in_specs=in_specs,
            out_specs=out_specs,
            scratch_shapes=scratch_shapes,
        ),
        compiler_params=pltpu.CompilerParams(
            # K/V scratch is refilled at l == 0 and carried across L tiles, so
            # the L axis must stay sequential; the batch axis splits across
            # megacore TensorCores.
            dimension_semantics=("parallel", "arbitrary"),
            vmem_limit_bytes=vmem_limit,
        ),
        cost_estimate=cost,
    )(q, k, v, m)

    V = results[0].reshape(B, L, H, D)   # free split of the merged minor dim
    if output_attention:
        return V, results[1]
    return V, None


def _reference_full_attention(queries, keys, values, attn_mask, scale=None):
    B, L, H, E = queries.shape
    _, S, _, D = values.shape
    scale = scale if scale is not None else 1.0 / math.sqrt(E)
    scores = jnp.einsum('blhe,bshe->bhls', queries, keys)
    scores = jnp.where(jnp.broadcast_to(attn_mask, (B, H, L, S)) == 0,
                       -jnp.inf, scores)
    A = jax.nn.softmax(scale * scores, axis=-1)
    V = jnp.einsum('bhls,bshd->blhd', A, values)
    return V, A


if __name__ == "__main__":
    key = jax.random.PRNGKey(0)
    B, L, S, H, E, D = 2, 8, 8, 2, 32, 32

    kq, kk, kv = jax.random.split(key, 3)
    queries = jax.random.normal(kq, (B, L, H, E), dtype=jnp.float32)
    keys = jax.random.normal(kk, (B, S, H, E), dtype=jnp.float32)
    values = jax.random.normal(kv, (B, S, H, D), dtype=jnp.float32)

    # Causal keep-mask (nonzero = keep, 0 = mask), un-broadcast head dim.
    causal = jnp.tril(jnp.ones((L, S), dtype=jnp.float32)) > 0
    attn_mask = jnp.broadcast_to(causal, (B, 1, L, S))

    # Variant with the attention matrix emitted (exact normalization).
    V1, A1 = full_attention(queries, keys, values, attn_mask,
                            scale=None, output_attention=True)
    # Fast path: no (B,H,L,S) writeback, deferred softmax normalization.
    V0, A0 = full_attention(queries, keys, values, attn_mask,
                            scale=None, output_attention=False)
    V1 = jax.block_until_ready(V1)
    A1 = jax.block_until_ready(A1)
    V0 = jax.block_until_ready(V0)
    assert A0 is None

    V_ref, A_ref = _reference_full_attention(queries, keys, values, attn_mask)

    # Tolerance covers the EUP approximate reciprocal on the fast path.
    TOL = 2e-2
    assert jnp.allclose(V1, V_ref, atol=TOL, rtol=TOL), "V (with A) mismatch vs reference"
    assert jnp.allclose(A1, A_ref, atol=TOL, rtol=TOL), "A mismatch vs reference"
    assert jnp.allclose(V0, V_ref, atol=TOL, rtol=TOL), "V (fast path) mismatch vs reference"

    print("KERNEL_OK")
</pallas_src>

<mosaic_0001>
module attributes {stable_mosaic.version = 11 : i64} {
  func.func @kernel(%arg0: i32, %arg1: i32, %arg2: memref<1x8x64xf32, #tpu.memory_space<vmem>>, %arg3: memref<1x8x64xf32, #tpu.memory_space<vmem>>, %arg4: memref<1x8x64xf32, #tpu.memory_space<vmem>>, %arg5: memref<1x1x8x8xi8, #tpu.memory_space<vmem>>, %arg6: memref<1x8x64xf32, #tpu.memory_space<vmem>>, %arg7: memref<1x2x8x8xf32, #tpu.memory_space<vmem>>, %arg8: memref<2x8x32xf32, #tpu.memory_space<vmem>>, %arg9: memref<2x8x32xf32, #tpu.memory_space<vmem>>) attributes {dimension_semantics = [#tpu.dimension_semantics<parallel>, #tpu.dimension_semantics<arbitrary>], iteration_bounds = array<i64: 2, 1>, scalar_prefetch = 0 : i64, scratch_operands = 2 : i64, tpu.core_type = #tpu.core_type<tc>, window_params = [{transform_indices = @transform_0, window_bounds = array<i64: 1, 8, 64>}, {transform_indices = @transform_1, window_bounds = array<i64: 1, 8, 64>}, {transform_indices = @transform_2, window_bounds = array<i64: 1, 8, 64>}, {transform_indices = @transform_3, window_bounds = array<i64: 1, 1, 8, 8>}, {transform_indices = @transform_4, window_bounds = array<i64: 1, 8, 64>}, {transform_indices = @transform_5, window_bounds = array<i64: 1, 2, 8, 8>}]} {
    %c0_i32 = arith.constant 0 : i32
    %0 = arith.cmpi eq, %arg1, %c0_i32 : i32
    %1 = arith.extui %0 : i1 to i32
    %c0_i32_0 = arith.constant 0 : i32
    %2 = arith.cmpi ne, %1, %c0_i32_0 : i32
    scf.if %2 {
      %c0_40 = arith.constant 0 : index
      %c0_41 = arith.constant 0 : index
      %c0_42 = arith.constant 0 : index
      %59 = vector.load %arg3[%c0_40, %c0_41, %c0_42] : memref<1x8x64xf32, #tpu.memory_space<vmem>>, vector<1x8x64xf32>
      %60 = vector.shape_cast %59 : vector<1x8x64xf32> to vector<8x64xf32>
      %c0_43 = arith.constant 0 : index
      %c0_44 = arith.constant 0 : index
      %c0_45 = arith.constant 0 : index
      %61 = vector.load %arg4[%c0_43, %c0_44, %c0_45] : memref<1x8x64xf32, #tpu.memory_space<vmem>>, vector<1x8x64xf32>
      %62 = vector.shape_cast %61 : vector<1x8x64xf32> to vector<8x64xf32>
      %63 = vector.extract_strided_slice %60 {offsets = [0, 0], sizes = [8, 32], strides = [1, 1]} : vector<8x64xf32> to vector<8x32xf32>
      %c0_46 = arith.constant 0 : index
      %c0_47 = arith.constant 0 : index
      %c0_48 = arith.constant 0 : index
      %64 = vector.load %arg8[%c0_46, %c0_47, %c0_48] : memref<2x8x32xf32, #tpu.memory_space<vmem>>, vector<1x8x32xf32>
      %65 = vector.shape_cast %64 : vector<1x8x32xf32> to vector<8x32xf32>
      %66 = vector.shape_cast %63 : vector<8x32xf32> to vector<1x8x32xf32>
      tpu.vector_store %arg8[%c0_46, %c0_47, %c0_48], %66 {strides = array<i32>} : memref<2x8x32xf32, #tpu.memory_space<vmem>>, vector<1x8x32xf32>,
      %67 = vector.extract_strided_slice %62 {offsets = [0, 0], sizes = [8, 32], strides = [1, 1]} : vector<8x64xf32> to vector<8x32xf32>
      %c0_49 = arith.constant 0 : index
      %c0_50 = arith.constant 0 : index
      %c0_51 = arith.constant 0 : index
      %68 = vector.load %arg9[%c0_49, %c0_50, %c0_51] : memref<2x8x32xf32, #tpu.memory_space<vmem>>, vector<1x8x32xf32>
      %69 = vector.shape_cast %68 : vector<1x8x32xf32> to vector<8x32xf32>
      %70 = vector.shape_cast %67 : vector<8x32xf32> to vector<1x8x32xf32>
      tpu.vector_store %arg9[%c0_49, %c0_50, %c0_51], %70 {strides = array<i32>} : memref<2x8x32xf32, #tpu.memory_space<vmem>>, vector<1x8x32xf32>,
      %71 = vector.extract_strided_slice %60 {offsets = [0, 32], sizes = [8, 32], strides = [1, 1]} : vector<8x64xf32> to vector<8x32xf32>
      %c1_52 = arith.constant 1 : index
      %c0_53 = arith.constant 0 : index
      %c0_54 = arith.constant 0 : index
      %72 = vector.load %arg8[%c1_52, %c0_53, %c0_54] : memref<2x8x32xf32, #tpu.memory_space<vmem>>, vector<1x8x32xf32>
      %73 = vector.shape_cast %72 : vector<1x8x32xf32> to vector<8x32xf32>
      %74 = vector.shape_cast %71 : vector<8x32xf32> to vector<1x8x32xf32>
      tpu.vector_store %arg8[%c1_52, %c0_53, %c0_54], %74 {strides = array<i32>} : memref<2x8x32xf32, #tpu.memory_space<vmem>>, vector<1x8x32xf32>,
      %75 = vector.extract_strided_slice %62 {offsets = [0, 32], sizes = [8, 32], strides = [1, 1]} : vector<8x64xf32> to vector<8x32xf32>
      %c1_55 = arith.constant 1 : index
      %c0_56 = arith.constant 0 : index
      %c0_57 = arith.constant 0 : index
      %76 = vector.load %arg9[%c1_55, %c0_56, %c0_57] : memref<2x8x32xf32, #tpu.memory_space<vmem>>, vector<1x8x32xf32>
      %77 = vector.shape_cast %76 : vector<1x8x32xf32> to vector<8x32xf32>
      %78 = vector.shape_cast %75 : vector<8x32xf32> to vector<1x8x32xf32>
      tpu.vector_store %arg9[%c1_55, %c0_56, %c0_57], %78 {strides = array<i32>} : memref<2x8x32xf32, #tpu.memory_space<vmem>>, vector<1x8x32xf32>,
    } else {
    }
    %c0 = arith.constant 0 : index
    %c0_1 = arith.constant 0 : index
    %c0_2 = arith.constant 0 : index
    %3 = vector.load %arg2[%c0, %c0_1, %c0_2] : memref<1x8x64xf32, #tpu.memory_space<vmem>>, vector<1x8x64xf32>
    %4 = vector.shape_cast %3 : vector<1x8x64xf32> to vector<8x64xf32>
    %c0_3 = arith.constant 0 : index
    %c0_4 = arith.constant 0 : index
    %c0_5 = arith.constant 0 : index
    %c0_6 = arith.constant 0 : index
    %5 = vector.load %arg5[%c0_3, %c0_4, %c0_5, %c0_6] : memref<1x1x8x8xi8, #tpu.memory_space<vmem>>, vector<1x1x8x8xi8>
    %6 = vector.shape_cast %5 : vector<1x1x8x8xi8> to vector<8x8xi8>
    %c0_i8 = arith.constant 0 : i8
    %7 = vector.broadcast %c0_i8 : i8 to vector<8x8xi8>
    %8 = arith.cmpi ne, %6, %7 : vector<8x8xi8>
    %9 = vector.extract_strided_slice %4 {offsets = [0, 0], sizes = [8, 32], strides = [1, 1]} : vector<8x64xf32> to vector<8x32xf32>
    %cst = arith.constant 0.176776692 : f32
    %10 = vector.broadcast %cst : f32 to vector<8x32xf32>
    %11 = arith.mulf %9, %10 : vector<8x32xf32>
    %c0_7 = arith.constant 0 : index
    %c0_8 = arith.constant 0 : index
    %c0_9 = arith.constant 0 : index
    %12 = vector.load %arg8[%c0_7, %c0_8, %c0_9] : memref<2x8x32xf32, #tpu.memory_space<vmem>>, vector<1x8x32xf32>
    %13 = vector.shape_cast %12 : vector<1x8x32xf32> to vector<8x32xf32>
    %c0_10 = arith.constant 0 : index
    %c0_11 = arith.constant 0 : index
    %c0_12 = arith.constant 0 : index
    %14 = vector.load %arg9[%c0_10, %c0_11, %c0_12] : memref<2x8x32xf32, #tpu.memory_space<vmem>>, vector<1x8x32xf32>
    %15 = vector.shape_cast %14 : vector<1x8x32xf32> to vector<8x32xf32>
    %cst_13 = arith.constant dense<0.000000e+00> : vector<8x8xf32>
    %16 = tpu.matmul %11, %13, %cst_13 {dimension_numbers = #tpu.dot_dimension_numbers<[1], [1], [0], [0], [0, 0, 1, 0], [], []>} : vector<8x32xf32>, vector<8x32xf32>, vector<8x8xf32> -> vector<8x8xf32>
    %cst_14 = arith.constant 0xFF800000 : f32
    %17 = vector.broadcast %cst_14 : f32 to vector<8x8xf32>
    %18 = arith.select %8, %16, %17 : vector<8x8xi1>, vector<8x8xf32>
    %cst_15 = arith.constant dense<0xFF800000> : vector<8xf32>
    %19 = vector.multi_reduction <maximumf>, %18, %cst_15 [1] : vector<8x8xf32> to vector<8xf32>
    %20 = vector.shape_cast %19 : vector<8xf32> to vector<8x1xf32>
    %21 = vector.broadcast %20 : vector<8x1xf32> to vector<8x8xf32>
    %22 = arith.subf %18, %21 : vector<8x8xf32>
    %23 = math.exp %22 : vector<8x8xf32>
    %cst_16 = arith.constant dense<0.000000e+00> : vector<8xf32>
    %24 = vector.multi_reduction <add>, %23, %cst_16 [1] : vector<8x8xf32> to vector<8xf32>
    %25 = vector.shape_cast %24 : vector<8xf32> to vector<8x1xf32>
    %26 = vector.broadcast %25 : vector<8x1xf32> to vector<8x8xf32>
    %27 = arith.divf %23, %26 : vector<8x8xf32>
    %c0_17 = arith.constant 0 : index
    %c0_18 = arith.constant 0 : index
    %c0_19 = arith.constant 0 : index
    %c0_20 = arith.constant 0 : index
    %28 = vector.load %arg7[%c0_17, %c0_18, %c0_19, %c0_20] : memref<1x2x8x8xf32, #tpu.memory_space<vmem>>, vector<1x1x8x8xf32>
    %29 = vector.shape_cast %28 : vector<1x1x8x8xf32> to vector<8x8xf32>
    %30 = vector.shape_cast %27 : vector<8x8xf32> to vector<1x1x8x8xf32>
    tpu.vector_store %arg7[%c0_17, %c0_18, %c0_19, %c0_20], %30 {strides = array<i32>} : memref<1x2x8x8xf32, #tpu.memory_space<vmem>>, vector<1x1x8x8xf32>,
    %cst_21 = arith.constant dense<0.000000e+00> : vector<8x32xf32>
    %31 = tpu.matmul %27, %15, %cst_21 {dimension_numbers = #tpu.dot_dimension_numbers<[1], [0], [0], [1], [0, 0, 1, 1], [], []>} : vector<8x8xf32>, vector<8x32xf32>, vector<8x32xf32> -> vector<8x32xf32>
    %32 = vector.extract_strided_slice %4 {offsets = [0, 32], sizes = [8, 32], strides = [1, 1]} : vector<8x64xf32> to vector<8x32xf32>
    %cst_22 = arith.constant 0.176776692 : f32
    %33 = vector.broadcast %cst_22 : f32 to vector<8x32xf32>
    %34 = arith.mulf %32, %33 : vector<8x32xf32>
    %c1 = arith.constant 1 : index
    %c0_23 = arith.constant 0 : index
    %c0_24 = arith.constant 0 : index
    %35 = vector.load %arg8[%c1, %c0_23, %c0_24] : memref<2x8x32xf32, #tpu.memory_space<vmem>>, vector<1x8x32xf32>
    %36 = vector.shape_cast %35 : vector<1x8x32xf32> to vector<8x32xf32>
    %c1_25 = arith.constant 1 : index
    %c0_26 = arith.constant 0 : index
    %c0_27 = arith.constant 0 : index
    %37 = vector.load %arg9[%c1_25, %c0_26, %c0_27] : memref<2x8x32xf32, #tpu.memory_space<vmem>>, vector<1x8x32xf32>
    %38 = vector.shape_cast %37 : vector<1x8x32xf32> to vector<8x32xf32>
    %cst_28 = arith.constant dense<0.000000e+00> : vector<8x8xf32>
    %39 = tpu.matmul %34, %36, %cst_28 {dimension_numbers = #tpu.dot_dimension_numbers<[1], [1], [0], [0], [0, 0, 1, 0], [], []>} : vector<8x32xf32>, vector<8x32xf32>, vector<8x8xf32> -> vector<8x8xf32>
    %cst_29 = arith.constant 0xFF800000 : f32
    %40 = vector.broadcast %cst_29 : f32 to vector<8x8xf32>
    %41 = arith.select %8, %39, %40 : vector<8x8xi1>, vector<8x8xf32>
    %cst_30 = arith.constant dense<0xFF800000> : vector<8xf32>
    %42 = vector.multi_reduction <maximumf>, %41, %cst_30 [1] : vector<8x8xf32> to vector<8xf32>
    %43 = vector.shape_cast %42 : vector<8xf32> to vector<8x1xf32>
    %44 = vector.broadcast %43 : vector<8x1xf32> to vector<8x8xf32>
    %45 = arith.subf %41, %44 : vector<8x8xf32>
    %46 = math.exp %45 : vector<8x8xf32>
    %cst_31 = arith.constant dense<0.000000e+00> : vector<8xf32>
    %47 = vector.multi_reduction <add>, %46, %cst_31 [1] : vector<8x8xf32> to vector<8xf32>
    %48 = vector.shape_cast %47 : vector<8xf32> to vector<8x1xf32>
    %49 = vector.broadcast %48 : vector<8x1xf32> to vector<8x8xf32>
    %50 = arith.divf %46, %49 : vector<8x8xf32>
    %c0_32 = arith.constant 0 : index
    %c1_33 = arith.constant 1 : index
    %c0_34 = arith.constant 0 : index
    %c0_35 = arith.constant 0 : index
    %51 = vector.load %arg7[%c0_32, %c1_33, %c0_34, %c0_35] : memref<1x2x8x8xf32, #tpu.memory_space<vmem>>, vector<1x1x8x8xf32>
    %52 = vector.shape_cast %51 : vector<1x1x8x8xf32> to vector<8x8xf32>
    %53 = vector.shape_cast %50 : vector<8x8xf32> to vector<1x1x8x8xf32>
    tpu.vector_store %arg7[%c0_32, %c1_33, %c0_34, %c0_35], %53 {strides = array<i32>} : memref<1x2x8x8xf32, #tpu.memory_space<vmem>>, vector<1x1x8x8xf32>,
    %cst_36 = arith.constant dense<0.000000e+00> : vector<8x32xf32>
    %54 = tpu.matmul %50, %38, %cst_36 {dimension_numbers = #tpu.dot_dimension_numbers<[1], [0], [0], [1], [0, 0, 1, 1], [], []>} : vector<8x8xf32>, vector<8x32xf32>, vector<8x32xf32> -> vector<8x32xf32>
    %55 = tpu.concatenate %31, %54 in 1 : vector<8x32xf32>, vector<8x32xf32> -> vector<8x64xf32>
    %c0_37 = arith.constant 0 : index
    %c0_38 = arith.constant 0 : index
    %c0_39 = arith.constant 0 : index
    %56 = vector.load %arg6[%c0_37, %c0_38, %c0_39] : memref<1x8x64xf32, #tpu.memory_space<vmem>>, vector<1x8x64xf32>
    %57 = vector.shape_cast %56 : vector<1x8x64xf32> to vector<8x64xf32>
    %58 = vector.shape_cast %55 : vector<8x64xf32> to vector<1x8x64xf32>
    tpu.vector_store %arg6[%c0_37, %c0_38, %c0_39], %58 {strides = array<i32>} : memref<1x8x64xf32, #tpu.memory_space<vmem>>, vector<1x8x64xf32>,
    return
  }
  func.func @transform_0(%arg0: i32, %arg1: i32) -> (i32, i32, i32) {
    %c0_i32 = arith.constant 0 : i32
    %c0_i32_0 = arith.constant 0 : i32
    return %arg0, %arg1, %c0_i32 : i32, i32, i32
  }
  func.func @transform_1(%arg0: i32, %arg1: i32) -> (i32, i32, i32) {
    %c0_i32 = arith.constant 0 : i32
    %c0_i32_0 = arith.constant 0 : i32
    %c0_i32_1 = arith.constant 0 : i32
    return %arg0, %c0_i32, %c0_i32_0 : i32, i32, i32
  }
  func.func @transform_2(%arg0: i32, %arg1: i32) -> (i32, i32, i32) {
    %c0_i32 = arith.constant 0 : i32
    %c0_i32_0 = arith.constant 0 : i32
    %c0_i32_1 = arith.constant 0 : i32
    return %arg0, %c0_i32, %c0_i32_0 : i32, i32, i32
  }
  func.func @transform_3(%arg0: i32, %arg1: i32) -> (i32, i32, i32, i32) {
    %c0_i32 = arith.constant 0 : i32
    %c0_i32_0 = arith.constant 0 : i32
    %c0_i32_1 = arith.constant 0 : i32
    return %arg0, %c0_i32, %arg1, %c0_i32_0 : i32, i32, i32, i32
  }
  func.func @transform_4(%arg0: i32, %arg1: i32) -> (i32, i32, i32) {
    %c0_i32 = arith.constant 0 : i32
    %c0_i32_0 = arith.constant 0 : i32
    return %arg0, %arg1, %c0_i32 : i32, i32, i32
  }
  func.func @transform_5(%arg0: i32, %arg1: i32) -> (i32, i32, i32, i32) {
    %c0_i32 = arith.constant 0 : i32
    %c0_i32_0 = arith.constant 0 : i32
    %c0_i32_1 = arith.constant 0 : i32
    return %arg0, %c0_i32, %arg1, %c0_i32_0 : i32, i32, i32, i32
  }
}

</mosaic_0001>

<llo_original>
// kernel: tpu_custom_call.1
$region0: #{tpu_custom_call.1}
  #allocation0 [shape = 'u32[]', space=smem, size = 0x4, offset = 0x4, fixed_abs, tag = 'smem constant byte address 0x4 - core index']
  #allocation1 [shape = 'u32[144,128]{1,0:T(1,128)}', space=vmem, size = 0x12000, scoped, tag = 'internal scratch']
  #allocation2 [shape = 'f32[2,8,32]{2,1,0:T(8,128)}', space=vmem, size = 0x2000, scoped, tag = 'scratch operand']
  #allocation3 [shape = 'f32[2,8,32]{2,1,0:T(8,128)}', space=vmem, size = 0x2000, scoped, tag = 'scratch operand']
  %s0 = inlined_call_operand.hbm [shape: f32[2,8,64], index: 0, kind: input, shape index: {}]
  %s1 = inlined_call_operand.hbm [shape: f32[2,8,64], index: 1, kind: input, shape index: {}]
  %s2 = inlined_call_operand.hbm [shape: f32[2,8,64], index: 2, kind: input, shape index: {}]
  %s3 = inlined_call_operand.vmem [shape: s8[2,1,8,8], index: 3, kind: input, shape index: {}]
  %s4 = inlined_call_operand.hbm [shape: f32[2,8,64], index: 4, kind: output, shape index: {0}]
  %s5 = inlined_call_operand.hbm [shape: f32[2,2,8,8], index: 5, kind: output, shape index: {1}]
  %6 = xla_tuple %s4, %s5
  %s7 = sld [smem:[#allocation0]]
  $region73: #{tpu_custom_call.1} parent=0
    _
  %s9 = ssub.s32 1, %s7
  %s10 = scalar_select 0, %s9, %s7
  $region1: #{tpu_custom_call.1} parent=0
    #allocation4 [shape = 'u8[8192]{0}', space=vmem, size = 0x2000, scoped, tag = 'input window, operand 0']
    #allocation5 [shape = 's32[2]{0}', space=sflag, size = 0x8, scoped, tag = 'scoped memory for tpu_custom_call.1']
    #allocation6 [shape = 's32[2]{0}', space=sflag, size = 0x8, scoped, tag = 'scoped memory for tpu_custom_call.1']
    #allocation7 [shape = 'u8[8192]{0}', space=vmem, size = 0x2000, scoped, tag = 'input window, operand 1']
    #allocation8 [shape = 's32[2]{0}', space=sflag, size = 0x8, scoped, tag = 'scoped memory for tpu_custom_call.1']
    #allocation9 [shape = 'u8[8192]{0}', space=vmem, size = 0x2000, scoped, tag = 'input window, operand 2']
    #allocation10 [shape = 'u8[8192]{0}', space=vmem, size = 0x2000, scoped, tag = 'output window, operand 0']
    #allocation11 [shape = 'u8[16384]{0}', space=vmem, size = 0x4000, scoped, tag = 'output window, operand 1']
    #allocation12 [shape = 's32[2]{0}', space=sflag, size = 0x8, scoped, tag = 'scoped memory for tpu_custom_call.1']
    %11 = vsyncpa [#allocation5], 0
    %s12 = scalar_lea.sflag [#allocation5], 1
    %13 = vsyncpa %s12, 0
    %14 = vsyncpa [#allocation8], 0
    %s15 = scalar_lea.sflag [#allocation8], 1
    %16 = vsyncpa %s15, 0
    %17 = vsyncpa [#allocation6], 0
    %s18 = scalar_lea.sflag [#allocation6], 1
    %19 = vsyncpa %s18, 0
    %20 = vsyncpa [#allocation12], 0
    %s21 = scalar_lea.sflag [#allocation12], 1
    %22 = vsyncpa %s21, 0
    loop: start=0, step=1, limit=4
    $region2: #{tpu_custom_call.1} parent=1 // loop_pre_header
      _
    $region3: #{tpu_custom_call.1} parent=1 // loop_header
      %s24 = sphi 0, %s28
      %p25 = scmp.ge.s32.totalorder %s24, 4
      %s31 = sphi 0, %s43
      %s32 = sphi 0, %s39
      %s33 = sphi 0, %s31
      %s34 = sphi 0, %s32
      %s35 = sphi 0, %s33
      %s36 = sphi 0, %s34
      %s48 = sphi 0, %s50
      %s51 = sphi 0, %s48
      %s52 = sphi 0, %s51
      %s68 = sphi 0, %s52
      %s74 = sphi 0, %s76
      %s77 = sphi 0, %s74
      %s78 = sphi 0, %s77
      %s94 = sphi 0, %s78
      %s100 = sphi 0, %s102
      %s103 = sphi 0, %s100
      %s104 = sphi 0, %s103
      %s120 = sphi 0, %s104
      %s128 = sphi 0, %s130
      %s131 = sphi 0, %s128
      %s132 = sphi 0, %s131
      %s148 = sphi 0, %s132
      %s156 = sphi 0, %s158
      %s159 = sphi 0, %s156
      %s160 = sphi 0, %s159
      %s176 = sphi 0, %s160
      %s184 = sphi 0, %s186
      %s187 = sphi 0, %s184
      %s188 = sphi 0, %s187
      %s204 = sphi 0, %s188
    $region4: #{tpu_custom_call.1} parent=1 // loop_header_branch
      %27 = sbr.rel (%p25) target = $region8
    $region5: #{tpu_custom_call.1} parent=1 // loop_body
      %s29 = ssub.s32 %s24, 1
      %s30 = ssub.s32 %s24, 2
      %s37 = sadd.s32 1, %s32
      %p38 = scmp.ge.s32.totalorder %s37, 1
      %s39 = scalar_select %p38, 0, %s37
      %s40 = sadd.s32 1, %s31
      %s41 = scalar_select %p38, %s40, %s31
      %p42 = scmp.ge.s32.totalorder %s41, 2
      %s43 = scalar_select %p42, 0, %s41
      %s44 = ssub.s32 %s31, %s43
      %s45 = ssub.s32 %s32, %s39
      %s46 = sor.u32 %s44, %s45
      %p47 = scmp.eq.s32.totalorder %s46, 0
      %s49 = sadd.s32 %s48, 1
      %s50 = scalar_select %p47, %s48, %s49
      %p53 = pneg %p47
      %p54 = scmp.eq.s32.totalorder %s24, 1
      %p55 = por %p53, %p54
      %p56 = scmp.ne.s32.totalorder %s48, %s51
      %p57 = scmp.eq.s32.totalorder %s24, 0
      %p58 = por %p56, %p57
      %p59 = scmp.ne.s32.totalorder %s48, %s51
      %p60 = scmp.eq.s32.totalorder %s29, 1
      %p61 = por %p59, %p60
      %p62 = scmp.ne.s32.totalorder %s51, %s52
      %p63 = scmp.eq.s32.totalorder %s29, 0
      %p64 = por %p62, %p63
      %p65 = scmp.ne.s32.totalorder %s51, %s52
      %p66 = scmp.eq.s32.totalorder %s30, 1
      %p67 = por %p65, %p66
      %p69 = scmp.ne.s32.totalorder %s52, %s68
      %p70 = scmp.eq.s32.totalorder %s30, 0
      %p71 = por %p69, %p70
      %s72 = ssub.s32 %s31, %s43
      %p73 = scmp.eq.s32.totalorder %s72, 0
      %s75 = sadd.s32 %s74, 1
      %s76 = scalar_select %p73, %s74, %s75
      %p79 = pneg %p73
      %p80 = scmp.eq.s32.totalorder %s24, 1
      %p81 = por %p79, %p80
      %p82 = scmp.ne.s32.totalorder %s74, %s77
      %p83 = scmp.eq.s32.totalorder %s24, 0
      %p84 = por %p82, %p83
      %p85 = scmp.ne.s32.totalorder %s74, %s77
      %p86 = scmp.eq.s32.totalorder %s29, 1
      %p87 = por %p85, %p86
      %p88 = scmp.ne.s32.totalorder %s77, %s78
      %p89 = scmp.eq.s32.totalorder %s29, 0
      %p90 = por %p88, %p89
      %p91 = scmp.ne.s32.totalorder %s77, %s78
      %p92 = scmp.eq.s32.totalorder %s30, 1
      %p93 = por %p91, %p92
      %p95 = scmp.ne.s32.totalorder %s78, %s94
      %p96 = scmp.eq.s32.totalorder %s30, 0
      %p97 = por %p95, %p96
      %s98 = ssub.s32 %s31, %s43
      %p99 = scmp.eq.s32.totalorder %s98, 0
      %s101 = sadd.s32 %s100, 1
      %s102 = scalar_select %p99, %s100, %s101
      %p105 = pneg %p99
      %p106 = scmp.eq.s32.totalorder %s24, 1
      %p107 = por %p105, %p106
      %p108 = scmp.ne.s32.totalorder %s100, %s103
      %p109 = scmp.eq.s32.totalorder %s24, 0
      %p110 = por %p108, %p109
      %p111 = scmp.ne.s32.totalorder %s100, %s103
      %p112 = scmp.eq.s32.totalorder %s29, 1
      %p113 = por %p111, %p112
      %p114 = scmp.ne.s32.totalorder %s103, %s104
      %p115 = scmp.eq.s32.totalorder %s29, 0
      %p116 = por %p114, %p115
      %p117 = scmp.ne.s32.totalorder %s103, %s104
      %p118 = scmp.eq.s32.totalorder %s30, 1
      %p119 = por %p117, %p118
      %p121 = scmp.ne.s32.totalorder %s104, %s120
      %p122 = scmp.eq.s32.totalorder %s30, 0
      %p123 = por %p121, %p122
      %s124 = ssub.s32 %s31, %s43
      %s125 = ssub.s32 %s32, %s39
      %s126 = sor.u32 %s124, %s125
      %p127 = scmp.eq.s32.totalorder %s126, 0
      %s129 = sadd.s32 %s128, 1
      %s130 = scalar_select %p127, %s128, %s129
      %p133 = pneg %p127
      %p134 = scmp.eq.s32.totalorder %s24, 1
      %p135 = por %p133, %p134
      %p136 = scmp.ne.s32.totalorder %s128, %s131
      %p137 = scmp.eq.s32.totalorder %s24, 0
      %p138 = por %p136, %p137
      %p139 = scmp.ne.s32.totalorder %s128, %s131
      %p140 = scmp.eq.s32.totalorder %s29, 1
      %p141 = por %p139, %p140
      %p142 = scmp.ne.s32.totalorder %s131, %s132
      %p143 = scmp.eq.s32.totalorder %s29, 0
      %p144 = por %p142, %p143
      %p145 = scmp.ne.s32.totalorder %s131, %s132
      %p146 = scmp.eq.s32.totalorder %s30, 1
      %p147 = por %p145, %p146
      %p149 = scmp.ne.s32.totalorder %s132, %s148
      %p150 = scmp.eq.s32.totalorder %s30, 0
      %p151 = por %p149, %p150
      %s152 = ssub.s32 %s31, %s43
      %s153 = ssub.s32 %s32, %s39
      %s154 = sor.u32 %s152, %s153
      %p155 = scmp.eq.s32.totalorder %s154, 0
      %s157 = sadd.s32 %s156, 1
      %s158 = scalar_select %p155, %s156, %s157
      %p161 = pneg %p155
      %p162 = scmp.eq.s32.totalorder %s24, 1
      %p163 = por %p161, %p162
      %p164 = scmp.ne.s32.totalorder %s156, %s159
      %p165 = scmp.eq.s32.totalorder %s24, 0
      %p166 = por %p164, %p165
      %p167 = scmp.ne.s32.totalorder %s156, %s159
      %p168 = scmp.eq.s32.totalorder %s29, 1
      %p169 = por %p167, %p168
      %p170 = scmp.ne.s32.totalorder %s159, %s160
      %p171 = scmp.eq.s32.totalorder %s29, 0
      %p172 = por %p170, %p171
      %p173 = scmp.ne.s32.totalorder %s159, %s160
      %p174 = scmp.eq.s32.totalorder %s30, 1
      %p175 = por %p173, %p174
      %p177 = scmp.ne.s32.totalorder %s160, %s176
      %p178 = scmp.eq.s32.totalorder %s30, 0
      %p179 = por %p177, %p178
      %s180 = ssub.s32 %s31, %s43
      %s181 = ssub.s32 %s32, %s39
      %s182 = sor.u32 %s180, %s181
      %p183 = scmp.eq.s32.totalorder %s182, 0
      %s185 = sadd.s32 %s184, 1
      %s186 = scalar_select %p183, %s184, %s185
      %p189 = pneg %p183
      %p190 = scmp.eq.s32.totalorder %s24, 1
      %p191 = por %p189, %p190
      %p192 = scmp.ne.s32.totalorder %s184, %s187
      %p193 = scmp.eq.s32.totalorder %s24, 0
      %p194 = por %p192, %p193
      %p195 = scmp.ne.s32.totalorder %s184, %s187
      %p196 = scmp.eq.s32.totalorder %s29, 1
      %p197 = por %p195, %p196
      %p198 = scmp.ne.s32.totalorder %s187, %s188
      %p199 = scmp.eq.s32.totalorder %s29, 0
      %p200 = por %p198, %p199
      %p201 = scmp.ne.s32.totalorder %s187, %s188
      %p202 = scmp.eq.s32.totalorder %s30, 1
      %p203 = por %p201, %p202
      %p205 = scmp.ne.s32.totalorder %s188, %s204
      %p206 = scmp.eq.s32.totalorder %s30, 0
      %p207 = por %p205, %p206
      %p208 = scmp.le.s32.totalorder 1, %s24
      %p209 = scmp.lt.s32.totalorder %s24, 3
      %p210 = pnand %p208, %p209
      %p211 = pneg %p210
      // Predicated region
      $region9: #{tpu_custom_call.1} parent=5 // pred_check
        _
      $region10: #{tpu_custom_call.1} parent=5 // pred_check_branch
        %213 = sbr.rel (%p210) target = $region12
      $region11: #{tpu_custom_call.1} parent=5 // pred_region
        %s214 = ssub.s32 %s24, 1
      $region12: #{tpu_custom_call.1} parent=5 // pred_fallthru
        _
      %p215 = scmp.lt.s32.totalorder %s24, 2
      // Predicated region
      $region13: #{tpu_custom_call.1} parent=5 // pred_check
        %p216 = pneg %p215
      $region14: #{tpu_custom_call.1} parent=5 // pred_check_branch
        %218 = sbr.rel (%p216) target = $region16
      $region15: #{tpu_custom_call.1} parent=5 // pred_region
        // Predicated region
        $region17: #{tpu_custom_call.1} parent=15 // pred_check
          %p219 = pneg %p58
        $region18: #{tpu_custom_call.1} parent=15 // pred_check_branch
          %221 = sbr.rel (%p219) target = $region20
        $region19: #{tpu_custom_call.1} parent=15 // pred_region
          %s222 = sand.u32 %s48, 1
          %s223 = scalar_lea.sflag [#allocation5], %s222
          %s224 = sand.u32 %s48, 1
          %s225 = smul.addr %s224, 8
          %s226 = scalar_lea.vmem [#allocation4], %s225
          %s228 = ssub.s32 128, 128
          %229 = vsyncadd %s223, %s228
          %s230 = sadd.s32 %s32, %s31
          %s231 = smul.addr %s230, 128
          %s232 = scalar_lea.hbm %s0, %s231
          %s234 = sshll.u32 %s226, 4
          %s235 = int_to_ptr.vmem [resolvable:$true] %s234
          %237 = dma.hbm_to_vmem [thread:$0]  %s232, 128, %s235, %s223
        $region20: #{tpu_custom_call.1} parent=15 // pred_fallthru
          _
        // Predicated region
        $region21: #{tpu_custom_call.1} parent=15 // pred_check
          %p238 = pneg %p84
        $region22: #{tpu_custom_call.1} parent=15 // pred_check_branch
          %240 = sbr.rel (%p238) target = $region24
        $region23: #{tpu_custom_call.1} parent=15 // pred_region
          %s241 = sand.u32 %s24, 1
          %s242 = scalar_lea.sflag [#allocation8], %s241
          %s243 = sand.u32 %s74, 1
          %s244 = smul.addr %s243, 8
          %s245 = scalar_lea.vmem [#allocation7], %s244
          %s247 = ssub.s32 128, 128
          %248 = vsyncadd %s242, %s247
          %s249 = smul.addr %s31, 128
          %s250 = scalar_lea.hbm %s1, %s249
          %s252 = sshll.u32 %s245, 4
          %s253 = int_to_ptr.vmem [resolvable:$true] %s252
          %255 = dma.hbm_to_vmem [thread:$0]  %s250, 128, %s253, %s242
        $region24: #{tpu_custom_call.1} parent=15 // pred_fallthru
          _
        // Predicated region
        $region25: #{tpu_custom_call.1} parent=15 // pred_check
          %p256 = pneg %p110
        $region26: #{tpu_custom_call.1} parent=15 // pred_check_branch
          %258 = sbr.rel (%p256) target = $region28
        $region27: #{tpu_custom_call.1} parent=15 // pred_region
          %s259 = sand.u32 %s24, 1
          %s260 = scalar_lea.sflag [#allocation8], %s259
          %s261 = sand.u32 %s100, 1
          %s262 = smul.addr %s261, 8
          %s263 = scalar_lea.vmem [#allocation9], %s262
          %s265 = ssub.s32 128, 128
          %266 = vsyncadd %s260, %s265
          %s267 = smul.addr %s31, 128
          %s268 = scalar_lea.hbm %s2, %s267
          %s270 = sshll.u32 %s263, 4
          %s271 = int_to_ptr.vmem [resolvable:$true] %s270
          %273 = dma.hbm_to_vmem [thread:$0]  %s268, 128, %s271, %s260
        $region28: #{tpu_custom_call.1} parent=15 // pred_fallthru
          _
        // Predicated region
        $region29: #{tpu_custom_call.1} parent=15 // pred_check
          %p274 = pneg %p138
        $region30: #{tpu_custom_call.1} parent=15 // pred_check_branch
          %276 = sbr.rel (%p274) target = $region32
        $region31: #{tpu_custom_call.1} parent=15 // pred_region
          %p277 = scmp.lt.s32.totalorder %s31, 1
          %s278 = scalar_select %p277, %s31, 1
          %p279 = scmp.lt.s32.totalorder %s32, 0
          %s280 = scalar_select %p279, %s32, 0
          %s281 = sadd.s32 %s280, %s278
          %s282 = smul.addr %s281, 2
          %s283 = scalar_lea.vmem %s3, %s282
        $region32: #{tpu_custom_call.1} parent=15 // pred_fallthru
          _
      $region16: #{tpu_custom_call.1} parent=5 // pred_fallthru
        _
      %p284 = scmp.le.s32.totalorder 1, %s24
      %p285 = scmp.lt.s32.totalorder %s24, 3
      %p286 = pnand %p284, %p285
      %p287 = pneg %p286
      // Predicated region
      $region33: #{tpu_custom_call.1} parent=5 // pred_check
        _
      $region34: #{tpu_custom_call.1} parent=5 // pred_check_branch
        %289 = sbr.rel (%p286) target = $region36
      $region35: #{tpu_custom_call.1} parent=5 // pred_region
        %s290 = ssub.s32 %s24, 1
        %s291 = sand.u32 %s51, 1
        %s292 = scalar_lea.sflag [#allocation5], %s291
        %s293 = sand.u32 %s51, 1
        %s294 = smul.addr %s293, 8
        %s295 = scalar_lea.vmem [#allocation4], %s294
        // Predicated region
        $region37: #{tpu_custom_call.1} parent=35 // pred_check
          %p296 = pneg %p64
        $region38: #{tpu_custom_call.1} parent=35 // pred_check_branch
          %298 = sbr.rel (%p296) target = $region40
        $region39: #{tpu_custom_call.1} parent=35 // pred_region
          %299 = dma.done %s292, 128
        $region40: #{tpu_custom_call.1} parent=35 // pred_fallthru
          _
        %s300 = sand.u32 %s29, 1
        %s301 = scalar_lea.sflag [#allocation8], %s300
        %s302 = sand.u32 %s77, 1
        %s303 = smul.addr %s302, 8
        %s304 = scalar_lea.vmem [#allocation7], %s303
        // Predicated region
        $region41: #{tpu_custom_call.1} parent=35 // pred_check
          %p305 = pneg %p90
        $region42: #{tpu_custom_call.1} parent=35 // pred_check_branch
          %307 = sbr.rel (%p305) target = $region44
        $region43: #{tpu_custom_call.1} parent=35 // pred_region
          %308 = dma.done %s301, 128
        $region44: #{tpu_custom_call.1} parent=35 // pred_fallthru
          _
        %s309 = sand.u32 %s29, 1
        %s310 = scalar_lea.sflag [#allocation8], %s309
        %s311 = sand.u32 %s103, 1
        %s312 = smul.addr %s311, 8
        %s313 = scalar_lea.vmem [#allocation9], %s312
        // Predicated region
        $region45: #{tpu_custom_call.1} parent=35 // pred_check
          %p314 = pneg %p116
        $region46: #{tpu_custom_call.1} parent=35 // pred_check_branch
          %316 = sbr.rel (%p314) target = $region48
        $region47: #{tpu_custom_call.1} parent=35 // pred_region
          %317 = dma.done %s310, 128
        $region48: #{tpu_custom_call.1} parent=35 // pred_fallthru
          _
        %s318 = sand.u32 %s51, 1
        %s319 = scalar_lea.sflag [#allocation5], %s318
        %s320 = sand.u32 %s51, 1
        %s321 = smul.addr %s320, 8
        %s322 = scalar_lea.vmem [#allocation4], %s321
        %p323 = pneg %p64
        %p324 = pneg %p61
        %s325 = sand.u32 %s29, 1
        %s326 = scalar_lea.sflag [#allocation8], %s325
        %s327 = sand.u32 %s77, 1
        %s328 = smul.addr %s327, 8
        %s329 = scalar_lea.vmem [#allocation7], %s328
        %p330 = pneg %p90
        %p331 = pneg %p87
        %s332 = sand.u32 %s29, 1
        %s333 = scalar_lea.sflag [#allocation8], %s332
        %s334 = sand.u32 %s103, 1
        %s335 = smul.addr %s334, 8
        %s336 = scalar_lea.vmem [#allocation9], %s335
        %p337 = pneg %p116
        %p338 = pneg %p113
        %p339 = scmp.lt.s32.totalorder %s33, 1
        %s340 = scalar_select %p339, %s33, 1
        %p341 = scmp.lt.s32.totalorder %s34, 0
        %s342 = scalar_select %p341, %s34, 0
        %s343 = sadd.s32 %s342, %s340
        %s344 = smul.addr %s343, 2
        %s345 = scalar_lea.vmem %s3, %s344
        %p346 = pneg %p144
        %p347 = pneg %p141
        %p348 = pneg %p172
        %p349 = pneg %p169
        %s350 = sand.u32 %s159, 1
        %s351 = scalar_lea.sflag [#allocation6], %s350
        %s352 = sand.u32 %s159, 1
        %s353 = smul.addr %s352, 8
        %s354 = scalar_lea.vmem [#allocation10], %s353
        %p355 = pneg %p200
        %p356 = pneg %p197
        %s357 = sand.u32 %s187, 1
        %s358 = scalar_lea.sflag [#allocation12], %s357
        %s359 = sand.u32 %s187, 1
        %s360 = smul.addr %s359, 16
        %s361 = scalar_lea.vmem [#allocation11], %s360
        %p362 = scmp.lt.s32.totalorder %s33, 1
        %s363 = scalar_select %p362, %s33, 1
        %p364 = scmp.lt.s32.totalorder %s34, 0
        %s365 = scalar_select %p364, %s34, 0
        %s366 = sadd.s32 %s365, %s363
        %s367 = smul.addr %s366, 2
        %s368 = scalar_lea.vmem %s3, %s367
        %p371 = scmp.eq.s32.totalorder %s34, 0
        // Predicated region
        $region49: #{tpu_custom_call.1} parent=35 // pred_check
          %p372 = pneg %p371
        $region50: #{tpu_custom_call.1} parent=35 // pred_check_branch
          %374 = sbr.rel (%p372) target = $region52
        $region51: #{tpu_custom_call.1} parent=35 // pred_region
          %v375 = vld [vmem:[%s304] sm:$0xff]
          %v376 = vld [vmem:[%s313] sm:$0xff]
          %vm377 = vcmask 261120
          %378 = vst.msk [vmem:[#allocation2] sm:$0xff] %vm377, %v375
          %379 = vst.msk [vmem:[#allocation3] sm:$0xff] %vm377, %v376
          %381 = vrot.lane.b32.xlu0 %v375, 96
          %v382 = vpop.permute.xlu0 %381
          %s384 = scalar_lea.vmem [#allocation2], 8
          %385 = vst.msk [vmem:[%s384] sm:$0xff] %vm377, %v382
          %387 = vrot.lane.b32.xlu0 %v376, 96
          %v388 = vpop.permute.xlu0 %387
          %s390 = scalar_lea.vmem [#allocation3], 8
          %391 = vst.msk [vmem:[%s390] sm:$0xff] %vm377, %v388
        $region52: #{tpu_custom_call.1} parent=35 // pred_fallthru
          _
        %v392 = vld [vmem:[%s295] sm:$0xff]
        %v393 = vld [vmem:[%s368] sm:$0x3]
        %vm394 = vnez %v393
        %v395 = vmul.f32 %v392, 0.17677669
        %v396 = vld [vmem:[#allocation2] sm:$0xff]
        %v397 = vld [vmem:[#allocation3] sm:$0xff]
        %vm398 = vcmask 261120
        %v400 = vsel %vm398, %v395, 0
        %v403 = vsel %vm398, %v396, 0
        %405 = vmatprep.subr.mxu0 0.0
        %406 = vmatpush1.xpose.msra.mxu0 0.0
        %407 = vmatprep.subr.mxu0 0.0
        %408 = vmatpush1.xpose.msra.mxu0 0.0
        %409 = vmatprep.subr.mxu0 0.0
        %410 = vmatpush1.xpose.msra.mxu0 0.0
        %411 = vmatprep.subr.mxu0 0.0
        %412 = vmatpush1.xpose.msra.mxu0 0.0
        %413 = vmatprep.subr.mxu0 0.0
        %414 = vmatpush1.xpose.msra.mxu0 0.0
        %415 = vmatprep.subr.mxu0 0.0
        %416 = vmatpush1.xpose.msra.mxu0 0.0
        %417 = vmatprep.subr.mxu0 0.0
        %418 = vmatpush1.xpose.msra.mxu0 0.0
        %419 = vmatprep.subr.mxu0 0.0
        %420 = vmatpush1.xpose.msra.mxu0 0.0
        %421 = vmatprep.subr.mxu0 0.0
        %422 = vmatpush1.xpose.msra.mxu0 0.0
        %423 = vmatprep.subr.mxu0 0.0
        %424 = vmatpush1.xpose.msra.mxu0 0.0
        %425 = vmatprep.subr.mxu0 0.0
        %426 = vmatpush1.xpose.msra.mxu0 0.0
        %427 = vmatprep.subr.mxu0 0.0
        %428 = vmatpush1.xpose.msra.mxu0 0.0
        %429 = vmatprep.subr.mxu0 0.0
        %430 = vmatpush1.xpose.msra.mxu0 0.0
        %431 = vmatprep.subr.mxu0 0.0
        %432 = vmatpush1.xpose.msra.mxu0 0.0
        %433 = vmatprep.subr.mxu0 0.0
        %434 = vmatpush1.xpose.msra.mxu0 0.0
        %435 = vmatprep.subr.mxu0 0.0
        %436 = vmatpush1.xpose.msra.mxu0 %v403
        %437 = vmatprep.subr.mxu0 0.0
        %438 = vmatpush2.xpose.msra.mxu0 0.0
        %439 = vmatprep.subr.mxu0 0.0
        %440 = vmatpush2.xpose.msra.mxu0 0.0
        %441 = vmatprep.subr.mxu0 0.0
        %442 = vmatpush2.xpose.msra.mxu0 0.0
        %443 = vmatprep.subr.mxu0 0.0
        %444 = vmatpush2.xpose.msra.mxu0 0.0
        %445 = vmatprep.subr.mxu0 0.0
        %446 = vmatpush2.xpose.msra.mxu0 0.0
        %447 = vmatprep.subr.mxu0 0.0
        %448 = vmatpush2.xpose.msra.mxu0 0.0
        %449 = vmatprep.subr.mxu0 0.0
        %450 = vmatpush2.xpose.msra.mxu0 0.0
        %451 = vmatprep.subr.mxu0 0.0
        %452 = vmatpush2.xpose.msra.mxu0 0.0
        %453 = vmatprep.subr.mxu0 0.0
        %454 = vmatpush2.xpose.msra.mxu0 0.0
        %455 = vmatprep.subr.mxu0 0.0
        %456 = vmatpush2.xpose.msra.mxu0 0.0
        %457 = vmatprep.subr.mxu0 0.0
        %458 = vmatpush2.xpose.msra.mxu0 0.0
        %459 = vmatprep.subr.mxu0 0.0
        %460 = vmatpush2.xpose.msra.mxu0 0.0
        %461 = vmatprep.subr.mxu0 0.0
        %462 = vmatpush2.xpose.msra.mxu0 0.0
        %463 = vmatprep.subr.mxu0 0.0
        %464 = vmatpush2.xpose.msra.mxu0 0.0
        %465 = vmatprep.subr.mxu0 0.0
        %466 = vmatpush2.xpose.msra.mxu0 0.0
        %467 = vmatprep.subr.mxu0 0.0
        %468 = vmatpush2.xpose.msra.mxu0 0.0
        %469 = vmatprep.mubr.f32.mxu0 0.0
        %470 = vmatmul.mubr.f32.gmra.mxu0 %v400
        %v471 = vpop.f32.mrf.mxu0
        %v472 = vadd.f32 0.0, %v471
        %v473 = vpop.f32.mrf.mxu0
        %474 = vdwg.mxu0
        %v475 = vsel %vm394, 16843009, 0
        %v476 = vunpack.c.0.s8 %v475
        %vm477 = vcmp.ne.s32.totalorder %v476, 0
        %v478 = vsel %vm477, %v472, -inf
        %vm479 = vcmask 64512
        %v480 = vsel %vm479, %v478, -inf
        %481 = vmax.xlane.f32.xlu0 %v480
        %v482 = vpop.xlane.xlu0 %481
        %v483 = vsub.f32 %v478, %v482
        %v484 = vmul.f32 %v483, 1.442695
        %v485 = vpow.pop %v484
        %v486 = vsel %vm479, %v485, 0.0
        %487 = vadd.xlane.f32.xlu0 %v486
        %v488 = vpop.xlane.xlu0 %487
        %v489 = vrcp.pop %v488
        %v490 = vmul.f32 %v485, %v489
        %491 = vst.msk [vmem:[%s361] sm:$0xff] %vm479, %v490
        %v493 = vsel %vm479, %v490, 0
        %495 = vmatprep.subr.mxu0 0.0
        %496 = vmatpush1.msra.mxu0 0.0
        %497 = vmatprep.subr.mxu0 0.0
        %498 = vmatpush1.msra.mxu0 0.0
        %499 = vmatprep.subr.mxu0 0.0
        %500 = vmatpush1.msra.mxu0 0.0
        %501 = vmatprep.subr.mxu0 0.0
        %502 = vmatpush1.msra.mxu0 0.0
        %503 = vmatprep.subr.mxu0 0.0
        %504 = vmatpush1.msra.mxu0 0.0
        %505 = vmatprep.subr.mxu0 0.0
        %506 = vmatpush1.msra.mxu0 0.0
        %507 = vmatprep.subr.mxu0 0.0
        %508 = vmatpush1.msra.mxu0 0.0
        %509 = vmatprep.subr.mxu0 0.0
        %510 = vmatpush1.msra.mxu0 0.0
        %511 = vmatprep.subr.mxu0 0.0
        %512 = vmatpush1.msra.mxu0 0.0
        %513 = vmatprep.subr.mxu0 0.0
        %514 = vmatpush1.msra.mxu0 0.0
        %515 = vmatprep.subr.mxu0 0.0
        %516 = vmatpush1.msra.mxu0 0.0
        %517 = vmatprep.subr.mxu0 0.0
        %518 = vmatpush1.msra.mxu0 0.0
        %519 = vmatprep.subr.mxu0 0.0
        %520 = vmatpush1.msra.mxu0 0.0
        %521 = vmatprep.subr.mxu0 0.0
        %522 = vmatpush1.msra.mxu0 0.0
        %523 = vmatprep.subr.mxu0 0.0
        %524 = vmatpush1.msra.mxu0 0.0
        %525 = vmatprep.subr.mxu0 0.0
        %526 = vmatpush1.msra.mxu0 %v397
        %527 = vmatprep.subr.mxu0 0.0
        %528 = vmatpush2.msra.mxu0 0.0
        %529 = vmatprep.subr.mxu0 0.0
        %530 = vmatpush2.msra.mxu0 0.0
        %531 = vmatprep.subr.mxu0 0.0
        %532 = vmatpush2.msra.mxu0 0.0
        %533 = vmatprep.subr.mxu0 0.0
        %534 = vmatpush2.msra.mxu0 0.0
        %535 = vmatprep.subr.mxu0 0.0
        %536 = vmatpush2.msra.mxu0 0.0
        %537 = vmatprep.subr.mxu0 0.0
        %538 = vmatpush2.msra.mxu0 0.0
        %539 = vmatprep.subr.mxu0 0.0
        %540 = vmatpush2.msra.mxu0 0.0
        %541 = vmatprep.subr.mxu0 0.0
        %542 = vmatpush2.msra.mxu0 0.0
        %543 = vmatprep.subr.mxu0 0.0
        %544 = vmatpush2.msra.mxu0 0.0
        %545 = vmatprep.subr.mxu0 0.0
        %546 = vmatpush2.msra.mxu0 0.0
        %547 = vmatprep.subr.mxu0 0.0
        %548 = vmatpush2.msra.mxu0 0.0
        %549 = vmatprep.subr.mxu0 0.0
        %550 = vmatpush2.msra.mxu0 0.0
        %551 = vmatprep.subr.mxu0 0.0
        %552 = vmatpush2.msra.mxu0 0.0
        %553 = vmatprep.subr.mxu0 0.0
        %554 = vmatpush2.msra.mxu0 0.0
        %555 = vmatprep.subr.mxu0 0.0
        %556 = vmatpush2.msra.mxu0 0.0
        %557 = vmatprep.subr.mxu0 0.0
        %558 = vmatpush2.msra.mxu0 0.0
        %559 = vmatprep.mubr.f32.mxu0 0.0
        %560 = vmatmul.mubr.f32.gmra.mxu0 %v493
        %v561 = vpop.f32.mrf.mxu0
        %v562 = vadd.f32 0.0, %v561
        %v563 = vpop.f32.mrf.mxu0
        %564 = vdwg.mxu0
        %s565 = scalar_lea.vmem [#allocation2], 8
        %v566 = vld [vmem:[%s565] sm:$0xff]
        %s567 = scalar_lea.vmem [#allocation3], 8
        %v568 = vld [vmem:[%s567] sm:$0xff]
        %569 = vrot.lane.b32.xlu0 %v395, 96
        %v570 = vpop.permute.xlu0 %569
        %v571 = vsel %vm398, %v570, 0
        %v574 = vsel %vm398, %v566, 0
        %576 = vmatprep.subr.mxu0 0.0
        %577 = vmatpush1.xpose.msra.mxu0 0.0
        %578 = vmatprep.subr.mxu0 0.0
        %579 = vmatpush1.xpose.msra.mxu0 0.0
        %580 = vmatprep.subr.mxu0 0.0
        %581 = vmatpush1.xpose.msra.mxu0 0.0
        %582 = vmatprep.subr.mxu0 0.0
        %583 = vmatpush1.xpose.msra.mxu0 0.0
        %584 = vmatprep.subr.mxu0 0.0
        %585 = vmatpush1.xpose.msra.mxu0 0.0
        %586 = vmatprep.subr.mxu0 0.0
        %587 = vmatpush1.xpose.msra.mxu0 0.0
        %588 = vmatprep.subr.mxu0 0.0
        %589 = vmatpush1.xpose.msra.mxu0 0.0
        %590 = vmatprep.subr.mxu0 0.0
        %591 = vmatpush1.xpose.msra.mxu0 0.0
        %592 = vmatprep.subr.mxu0 0.0
        %593 = vmatpush1.xpose.msra.mxu0 0.0
        %594 = vmatprep.subr.mxu0 0.0
        %595 = vmatpush1.xpose.msra.mxu0 0.0
        %596 = vmatprep.subr.mxu0 0.0
        %597 = vmatpush1.xpose.msra.mxu0 0.0
        %598 = vmatprep.subr.mxu0 0.0
        %599 = vmatpush1.xpose.msra.mxu0 0.0
        %600 = vmatprep.subr.mxu0 0.0
        %601 = vmatpush1.xpose.msra.mxu0 0.0
        %602 = vmatprep.subr.mxu0 0.0
        %603 = vmatpush1.xpose.msra.mxu0 0.0
        %604 = vmatprep.subr.mxu0 0.0
        %605 = vmatpush1.xpose.msra.mxu0 0.0
        %606 = vmatprep.subr.mxu0 0.0
        %607 = vmatpush1.xpose.msra.mxu0 %v574
        %608 = vmatprep.subr.mxu0 0.0
        %609 = vmatpush2.xpose.msra.mxu0 0.0
        %610 = vmatprep.subr.mxu0 0.0
        %611 = vmatpush2.xpose.msra.mxu0 0.0
        %612 = vmatprep.subr.mxu0 0.0
        %613 = vmatpush2.xpose.msra.mxu0 0.0
        %614 = vmatprep.subr.mxu0 0.0
        %615 = vmatpush2.xpose.msra.mxu0 0.0
        %616 = vmatprep.subr.mxu0 0.0
        %617 = vmatpush2.xpose.msra.mxu0 0.0
        %618 = vmatprep.subr.mxu0 0.0
        %619 = vmatpush2.xpose.msra.mxu0 0.0
        %620 = vmatprep.subr.mxu0 0.0
        %621 = vmatpush2.xpose.msra.mxu0 0.0
        %622 = vmatprep.subr.mxu0 0.0
        %623 = vmatpush2.xpose.msra.mxu0 0.0
        %624 = vmatprep.subr.mxu0 0.0
        %625 = vmatpush2.xpose.msra.mxu0 0.0
        %626 = vmatprep.subr.mxu0 0.0
        %627 = vmatpush2.xpose.msra.mxu0 0.0
        %628 = vmatprep.subr.mxu0 0.0
        %629 = vmatpush2.xpose.msra.mxu0 0.0
        %630 = vmatprep.subr.mxu0 0.0
        %631 = vmatpush2.xpose.msra.mxu0 0.0
        %632 = vmatprep.subr.mxu0 0.0
        %633 = vmatpush2.xpose.msra.mxu0 0.0
        %634 = vmatprep.subr.mxu0 0.0
        %635 = vmatpush2.xpose.msra.mxu0 0.0
        %636 = vmatprep.subr.mxu0 0.0
        %637 = vmatpush2.xpose.msra.mxu0 0.0
        %638 = vmatprep.subr.mxu0 0.0
        %639 = vmatpush2.xpose.msra.mxu0 0.0
        %640 = vmatprep.mubr.f32.mxu0 0.0
        %641 = vmatmul.mubr.f32.gmra.mxu0 %v571
        %v642 = vpop.f32.mrf.mxu0
        %v643 = vadd.f32 0.0, %v642
        %v644 = vpop.f32.mrf.mxu0
        %645 = vdwg.mxu0
        %v646 = vsel %vm477, %v643, -inf
        %v647 = vsel %vm479, %v646, -inf
        %648 = vmax.xlane.f32.xlu0 %v647
        %v649 = vpop.xlane.xlu0 %648
        %v650 = vsub.f32 %v646, %v649
        %v651 = vmul.f32 %v650, 1.442695
        %v652 = vpow.pop %v651
        %v653 = vsel %vm479, %v652, 0.0
        %654 = vadd.xlane.f32.xlu0 %v653
        %v655 = vpop.xlane.xlu0 %654
        %v656 = vrcp.pop %v655
        %v657 = vmul.f32 %v652, %v656
        %s658 = scalar_lea.vmem %s361, 8 [#allocation11]
        %659 = vst.msk [vmem:[%s658] sm:$0xff] %vm479, %v657
        %v661 = vsel %vm479, %v657, 0
        %663 = vmatprep.subr.mxu0 0.0
        %664 = vmatpush1.msra.mxu0 0.0
        %665 = vmatprep.subr.mxu0 0.0
        %666 = vmatpush1.msra.mxu0 0.0
        %667 = vmatprep.subr.mxu0 0.0
        %668 = vmatpush1.msra.mxu0 0.0
        %669 = vmatprep.subr.mxu0 0.0
        %670 = vmatpush1.msra.mxu0 0.0
        %671 = vmatprep.subr.mxu0 0.0
        %672 = vmatpush1.msra.mxu0 0.0
        %673 = vmatprep.subr.mxu0 0.0
        %674 = vmatpush1.msra.mxu0 0.0
        %675 = vmatprep.subr.mxu0 0.0
        %676 = vmatpush1.msra.mxu0 0.0
        %677 = vmatprep.subr.mxu0 0.0
        %678 = vmatpush1.msra.mxu0 0.0
        %679 = vmatprep.subr.mxu0 0.0
        %680 = vmatpush1.msra.mxu0 0.0
        %681 = vmatprep.subr.mxu0 0.0
        %682 = vmatpush1.msra.mxu0 0.0
        %683 = vmatprep.subr.mxu0 0.0
        %684 = vmatpush1.msra.mxu0 0.0
        %685 = vmatprep.subr.mxu0 0.0
        %686 = vmatpush1.msra.mxu0 0.0
        %687 = vmatprep.subr.mxu0 0.0
        %688 = vmatpush1.msra.mxu0 0.0
        %689 = vmatprep.subr.mxu0 0.0
        %690 = vmatpush1.msra.mxu0 0.0
        %691 = vmatprep.subr.mxu0 0.0
        %692 = vmatpush1.msra.mxu0 0.0
        %693 = vmatprep.subr.mxu0 0.0
        %694 = vmatpush1.msra.mxu0 %v568
        %695 = vmatprep.subr.mxu0 0.0
        %696 = vmatpush2.msra.mxu0 0.0
        %697 = vmatprep.subr.mxu0 0.0
        %698 = vmatpush2.msra.mxu0 0.0
        %699 = vmatprep.subr.mxu0 0.0
        %700 = vmatpush2.msra.mxu0 0.0
        %701 = vmatprep.subr.mxu0 0.0
        %702 = vmatpush2.msra.mxu0 0.0
        %703 = vmatprep.subr.mxu0 0.0
        %704 = vmatpush2.msra.mxu0 0.0
        %705 = vmatprep.subr.mxu0 0.0
        %706 = vmatpush2.msra.mxu0 0.0
        %707 = vmatprep.subr.mxu0 0.0
        %708 = vmatpush2.msra.mxu0 0.0
        %709 = vmatprep.subr.mxu0 0.0
        %710 = vmatpush2.msra.mxu0 0.0
        %711 = vmatprep.subr.mxu0 0.0
        %712 = vmatpush2.msra.mxu0 0.0
        %713 = vmatprep.subr.mxu0 0.0
        %714 = vmatpush2.msra.mxu0 0.0
        %715 = vmatprep.subr.mxu0 0.0
        %716 = vmatpush2.msra.mxu0 0.0
        %717 = vmatprep.subr.mxu0 0.0
        %718 = vmatpush2.msra.mxu0 0.0
        %719 = vmatprep.subr.mxu0 0.0
        %720 = vmatpush2.msra.mxu0 0.0
        %721 = vmatprep.subr.mxu0 0.0
        %722 = vmatpush2.msra.mxu0 0.0
        %723 = vmatprep.subr.mxu0 0.0
        %724 = vmatpush2.msra.mxu0 0.0
        %725 = vmatprep.subr.mxu0 0.0
        %726 = vmatpush2.msra.mxu0 0.0
        %727 = vmatprep.mubr.f32.mxu0 0.0
        %728 = vmatmul.mubr.f32.gmra.mxu0 %v661
        %v729 = vpop.f32.mrf.mxu0
        %v730 = vadd.f32 0.0, %v729
        %v731 = vpop.f32.mrf.mxu0
        %732 = vdwg.mxu0
        %734 = vrot.lane.b32.xlu0 %v730, 32
        %v735 = vpop.permute.xlu0 %734
        %v737 = vsel %vm398, %v562, %v735
        %vm738 = vcmask 523264
        %739 = vst.msk [vmem:[%s354] sm:$0xff] %vm738, %v737
        %s740 = sand.u32 %s159, 1
        %s741 = scalar_lea.sflag [#allocation6], %s740
        %s742 = sand.u32 %s159, 1
        %s743 = smul.addr %s742, 8
        %s744 = scalar_lea.vmem [#allocation10], %s743
        %s745 = sand.u32 %s187, 1
        %s746 = scalar_lea.sflag [#allocation12], %s745
        %s747 = sand.u32 %s187, 1
        %s748 = smul.addr %s747, 16
        %s749 = scalar_lea.vmem [#allocation11], %s748
        // Predicated region
        $region53: #{tpu_custom_call.1} parent=35 // pred_check
          %p750 = pneg %p169
        $region54: #{tpu_custom_call.1} parent=35 // pred_check_branch
          %752 = sbr.rel (%p750) target = $region56
        $region55: #{tpu_custom_call.1} parent=35 // pred_region
          %s754 = ssub.s32 128, 128
          %755 = vsyncadd %s741, %s754
          %s756 = sadd.s32 %s34, %s33
          %s757 = smul.addr %s756, 128
          %s758 = scalar_lea.hbm %s4, %s757
          %s760 = sshll.u32 %s744, 4
          %s761 = int_to_ptr.vmem [resolvable:$true] %s760
          %763 = dma.vmem_to_hbm [thread:$0]  %s761, 128, %s758, %s741
        $region56: #{tpu_custom_call.1} parent=35 // pred_fallthru
          _
        // Predicated region
        $region57: #{tpu_custom_call.1} parent=35 // pred_check
          %p764 = pneg %p197
        $region58: #{tpu_custom_call.1} parent=35 // pred_check_branch
          %766 = sbr.rel (%p764) target = $region60
        $region59: #{tpu_custom_call.1} parent=35 // pred_region
          %s768 = ssub.s32 256, 256
          %769 = vsyncadd %s746, %s768
          %s770 = smul.addr %s33, 2
          %s771 = sadd.s32 %s34, %s770
          %s772 = smul.addr %s771, 128
          %s773 = scalar_lea.hbm %s5, %s772
          %s774 = sshll.u32 %s749, 4
          %s775 = int_to_ptr.vmem [resolvable:$true] %s774
          %780 = dma.vmem_to_hbm [thread:$0]  %s775, 256, %s773, %s746, 128, 128, 8
        $region60: #{tpu_custom_call.1} parent=35 // pred_fallthru
          _
      $region36: #{tpu_custom_call.1} parent=5 // pred_fallthru
        _
      %p781 = scmp.le.s32.totalorder 2, %s24
      // Predicated region
      $region61: #{tpu_custom_call.1} parent=5 // pred_check
        %p782 = pneg %p781
      $region62: #{tpu_custom_call.1} parent=5 // pred_check_branch
        %784 = sbr.rel (%p782) target = $region64
      $region63: #{tpu_custom_call.1} parent=5 // pred_region
        %s785 = ssub.s32 %s24, 2
        // Predicated region
        $region65: #{tpu_custom_call.1} parent=63 // pred_check
          %p786 = pneg %p175
        $region66: #{tpu_custom_call.1} parent=63 // pred_check_branch
          %788 = sbr.rel (%p786) target = $region68
        $region67: #{tpu_custom_call.1} parent=63 // pred_region
          %s789 = sand.u32 %s160, 1
          %s790 = scalar_lea.sflag [#allocation6], %s789
          %s791 = sand.u32 %s160, 1
          %s792 = smul.addr %s791, 8
          %s793 = scalar_lea.vmem [#allocation10], %s792
          %794 = dma.done %s790, 128
        $region68: #{tpu_custom_call.1} parent=63 // pred_fallthru
          _
        // Predicated region
        $region69: #{tpu_custom_call.1} parent=63 // pred_check
          %p795 = pneg %p203
        $region70: #{tpu_custom_call.1} parent=63 // pred_check_branch
          %797 = sbr.rel (%p795) target = $region72
        $region71: #{tpu_custom_call.1} parent=63 // pred_region
          %s798 = sand.u32 %s188, 1
          %s799 = scalar_lea.sflag [#allocation12], %s798
          %s800 = sand.u32 %s188, 1
          %s801 = smul.addr %s800, 16
          %s802 = scalar_lea.vmem [#allocation11], %s801
          %803 = dma.done %s799, 256
        $region72: #{tpu_custom_call.1} parent=63 // pred_fallthru
          _
      $region64: #{tpu_custom_call.1} parent=5 // pred_fallthru
        _
    $region6: #{tpu_custom_call.1} parent=1 // loop_footer
      %s28 = sadd.s32 1, %s24
    $region7: #{tpu_custom_call.1} parent=1 // loop_footer_branch
      %23 = sbr.rel target = $region3
    $region8: #{tpu_custom_call.1} parent=1 // loop_exit
      _
    %804 = vsyncpa [#allocation5], 1
    %s805 = scalar_lea.sflag [#allocation5], 1
    %806 = vsyncpa %s805, 1
    %807 = vsyncpa [#allocation8], 1
    %s808 = scalar_lea.sflag [#allocation8], 1
    %809 = vsyncpa %s808, 1
    %810 = vsyncpa [#allocation6], 1
    %s811 = scalar_lea.sflag [#allocation6], 1
    %812 = vsyncpa %s811, 1
    %813 = vsyncpa [#allocation12], 1
    %s814 = scalar_lea.sflag [#allocation12], 1
    %815 = vsyncpa %s814, 1

</llo_original>
